<compile_context>
chip_gen: v6e
topology: v6e:2x2x1
jax: 0.10.0
libtpu: 0.0.40
codegen_flags: <defaults>
</compile_context>

<pallas_src>
import functools

import jax
import jax.numpy as jnp
from jax.experimental import pallas as pl
from jax.experimental.pallas import tpu as pltpu


# ----------------------------- tiling helpers ------------------------------ #

_LANE = 128
_SUBLANE = 8


def _vmem_limit_bytes():
    """Per-generation VMEM budget: ~3/4 of physical, capped at 96 MiB.
    v5e/v6e (128 MiB) -> 96 MiB, v7x (64 MiB) -> 48 MiB."""
    try:
        cap = int(pltpu.get_tpu_info().vmem_capacity_bytes)
    except Exception:
        cap = 64 * 1024 * 1024
    return min(96 * 1024 * 1024, (cap * 3) // 4)


def _block_target_bytes(vmem_limit, live_blocks):
    """Target block size: ~2 MiB (HBM-roofline-saturating on v5e/v6e/v7x),
    bounded so `live_blocks` buffers stay well under the VMEM budget."""
    return max(256 * 1024, min(2 * 1024 * 1024, vmem_limit // (3 * live_blocks)))


def _largest_divisor(total, preferred, granule):
    """Largest divisor of `total` that is <= preferred and a multiple of
    `granule`; None if no such divisor exists."""
    best = None
    i = 1
    while i * i <= total:
        if total % i == 0:
            for cand in (i, total // i):
                if cand <= preferred and cand % granule == 0:
                    if best is None or cand > best:
                        best = cand
        i += 1
    return best


def _pick_sublane_tile(c, preferred):
    if c <= preferred:
        return c                                  # full dim is always legal
    d = _largest_divisor(c, preferred, _SUBLANE)
    return d if d is not None else c


def _pick_lane_tile(hw, preferred):
    if hw <= preferred:
        return hw                                 # full dim is always legal
    d = _largest_divisor(hw, preferred, _LANE)    # lane-dense (multiple of 128)
    if d is not None:
        return d
    # TODO(synk): for HW with no 128-multiple divisor (e.g. 49, 196 feature
    # maps) add a masked / BoundedSlice tail instead of the full-row fallback.
    return hw


def _pick_tiles(c, hw, itemsize, block_target_bytes):
    """Pick (c_tile, hw_tile): lane-dense, divides the array, ~block_target."""
    c_tile = _pick_sublane_tile(c, 64)
    hw_pref = max(_LANE, (block_target_bytes // (c_tile * itemsize)) // _LANE * _LANE)
    hw_tile = _pick_lane_tile(hw, hw_pref)
    # If HW is small, grow the channel tile back toward the block target.
    c_pref = max(_SUBLANE,
                 (block_target_bytes // (hw_tile * itemsize)) // _SUBLANE * _SUBLANE)
    if c_pref > c_tile:
        c_tile = _pick_sublane_tile(c, c_pref)
    return c_tile, hw_tile


def _split_for_megacore(c, c_tile):
    """v7x shards parallel grid axes across 2 TensorCores.  The stats kernel's
    only parallel axis is C; give it >=2 steps when cheap.  No-op on v5e/v6e."""
    if c // c_tile == 1 and c_tile > _SUBLANE:
        half = _largest_divisor(c, c_tile // 2, _SUBLANE)
        if half is not None:
            return half
    return c_tile


# ----------------------------- kernels ------------------------------------- #

def _stats_kernel(x_ref, stats_ref, sum_sc, sq_sc, min_sc, max_sc, shift_sc,
                  *, epsilon, inv_count):
    """Accumulate per-channel stats over the (N, HW) reduction grid axes with
    purely elementwise (VPU) full-width partial accumulators; finalize
    [mean, rstd, xn_min, xn_max] (one XLU reduce per stat) on the last step."""
    n_idx = pl.program_id(1)
    hw_idx = pl.program_id(2)
    is_first = jnp.logical_and(n_idx == 0, hw_idx == 0)
    is_last = jnp.logical_and(n_idx == pl.num_programs(1) - 1,
                              hw_idx == pl.num_programs(2) - 1)

    x = x_ref[...].astype(jnp.float32)                    # (C_TILE, HW_TILE)

    @pl.when(is_first)
    def _():
        # Per-channel shift (mean of the first tile) stabilizes the
        # single-pass variance:  var = E[(x-s)^2] - (E[x-s])^2.
        shift_sc[...] = jnp.mean(x, axis=-1, keepdims=True)
        sum_sc[...] = jnp.zeros_like(sum_sc)
        sq_sc[...] = jnp.zeros_like(sq_sc)
        min_sc[...] = jnp.full_like(min_sc, jnp.inf)
        max_sc[...] = jnp.full_like(max_sc, -jnp.inf)

    # Hot loop: elementwise only (keeps the kernel DMA-bound; no XLU work).
    d = x - shift_sc[...]
    sum_sc[...] += d
    sq_sc[...] += d * d
    min_sc[...] = jnp.minimum(min_sc[...], x)
    max_sc[...] = jnp.maximum(max_sc[...], x)

    @pl.when(is_last)
    def _():
        s = jnp.sum(sum_sc[...], axis=-1, keepdims=True)      # (C_TILE, 1)
        sq = jnp.sum(sq_sc[...], axis=-1, keepdims=True)
        x_min = jnp.min(min_sc[...], axis=-1, keepdims=True)
        x_max = jnp.max(max_sc[...], axis=-1, keepdims=True)
        mean_d = s * inv_count
        mean = shift_sc[...] + mean_d
        var = jnp.maximum(sq * inv_count - mean_d * mean_d, 0.0)
        rstd = jax.lax.rsqrt(var + epsilon)
        # rstd > 0 (epsilon > 0, var >= 0) => raw min/max map to xn min/max.
        xn_min = (x_min - mean) * rstd
        xn_max = (x_max - mean) * rstd
        stats_ref[...] = jnp.concatenate([mean, rstd, xn_min, xn_max], axis=-1)


def _forward_kernel(x_ref, stats_ref, o_ref, *, compute_dtype):
    """y = clip(x * scale + bias, x_min, x_max) with packed per-channel stats."""
    stats = stats_ref[...].astype(compute_dtype)          # (C_TILE, 4)
    scale = stats[:, 0:1]
    bias = stats[:, 1:2]
    mn = stats[:, 2:3]
    mx = stats[:, 3:4]
    x = x_ref[...].astype(compute_dtype)                  # (C_TILE, HW_TILE)
    y = x * scale + bias
    y = jnp.maximum(mn, y)                                # torch.max(tmp_x_min, x)
    y = jnp.minimum(mx, y)                                # torch.min(tmp_x_max, x)
    o_ref[...] = y.astype(o_ref.dtype)


def _normalize_kernel(x_ref, stats_ref, o_ref):
    """xn = (x - mean) * rstd  (used only when compute_norm must return xn)."""
    stats = stats_ref[...]
    mean = stats[:, 0:1]
    rstd = stats[:, 1:2]
    x = x_ref[...].astype(jnp.float32)
    o_ref[...] = ((x - mean) * rstd).astype(o_ref.dtype)


# ----------------------------- wrappers ------------------------------------ #

def instance_norm_compute_norm(x_nchw, epsilon=1e-8, return_normalized=False):
    """Pallas version of InstanceNorm.compute_norm.

    Returns (stats, xn) where stats has shape (C, 4) with columns
    [mean, rstd, xn_min, xn_max] (the PyTorch (1,C,1,1) stats, packed).
    xn is None unless return_normalized=True (saves a full-tensor HBM write).
    """
    n, c, h, w = x_nchw.shape
    hw = h * w
    x3 = x_nchw.reshape(n, c, hw)                         # free, contiguous

    vmem_limit = _vmem_limit_bytes()
    # Live VMEM blocks: 2x input (double-buffered) + 4x full-width f32 scratch.
    block_target = _block_target_bytes(vmem_limit, live_blocks=6)
    c_tile, hw_tile = _pick_tiles(c, hw, 4, block_target)
    c_tile = _split_for_megacore(c, c_tile)               # >=2 parallel steps (v7x)
    inv_count = 1.0 / float(n * hw)

    stats = pl.pallas_call(
        functools.partial(_stats_kernel, epsilon=float(epsilon),
                          inv_count=inv_count),
        grid=(c // c_tile, n, hw // hw_tile),             # reduction axes last
        in_specs=[pl.BlockSpec((None, c_tile, hw_tile),
                               lambda ci, ni, hi: (ni, ci, hi))],
        out_specs=pl.BlockSpec((c_tile, 4), lambda ci, ni, hi: (ci, 0)),
        out_shape=jax.ShapeDtypeStruct((c, 4), jnp.float32),
        scratch_shapes=[pltpu.VMEM((c_tile, hw_tile), jnp.float32)] * 4
                       + [pltpu.VMEM((c_tile, 1), jnp.float32)],
        compiler_params=pltpu.CompilerParams(
            dimension_semantics=("parallel", "arbitrary", "arbitrary"),
            vmem_limit_bytes=vmem_limit),
    )(x3)

    if not return_normalized:
        return stats, None

    block_target = _block_target_bytes(vmem_limit, live_blocks=4)
    c_tile, hw_tile = _pick_tiles(c, hw, x_nchw.dtype.itemsize, block_target)
    xn3 = pl.pallas_call(
        _normalize_kernel,
        grid=(hw // hw_tile, n, c // c_tile),             # most-steps axis leads
        in_specs=[pl.BlockSpec((None, c_tile, hw_tile),
                               lambda hi, ni, ci: (ni, ci, hi)),
                  pl.BlockSpec((c_tile, 4), lambda hi, ni, ci: (ci, 0))],
        out_specs=pl.BlockSpec((None, c_tile, hw_tile),
                               lambda hi, ni, ci: (ni, ci, hi)),
        out_shape=jax.ShapeDtypeStruct((n, c, hw), x_nchw.dtype),
        compiler_params=pltpu.CompilerParams(
            dimension_semantics=("parallel", "parallel", "parallel"),
            vmem_limit_bytes=vmem_limit),
    )(x3, stats)
    return stats, xn3.reshape(n, c, h, w)


def instance_norm_forward(x_nchw, stats_list, style_weight=None):
    """Pallas version of InstanceNorm.forward.

    stats_list: list (len = style_num) of (C, 4) arrays [mean, rstd, min, max]
    as produced by instance_norm_compute_norm.  style_weight: list of floats.
    """
    if style_weight is None:
        style_weight = [1.0]

    # Weighted style combination on the *raw* stats (matches PyTorch), then
    # fold into scale/bias so the hot kernel is a single FMA-shaped op.
    stats = sum(s.astype(jnp.float32) * w for s, w in zip(stats_list, style_weight))
    mean, rstd = stats[:, 0:1], stats[:, 1:2]
    mn, mx = stats[:, 2:3], stats[:, 3:4]
    folded = jnp.concatenate([rstd, -mean * rstd, mn, mx], axis=-1)   # (C, 4)

    n, c, h, w = x_nchw.shape
    hw = h * w
    x3 = x_nchw.reshape(n, c, hw)

    # Compute natively in bf16 when x is bf16 (halves vreg pressure + HBM
    # traffic on v6e/v7x); otherwise f32.
    if x_nchw.dtype == jnp.bfloat16 or x_nchw.dtype == jnp.float32:
        compute_dtype = x_nchw.dtype
    else:
        compute_dtype = jnp.float32

    vmem_limit = _vmem_limit_bytes()
    block_target = _block_target_bytes(vmem_limit, live_blocks=4)
    c_tile, hw_tile = _pick_tiles(c, hw, x_nchw.dtype.itemsize, block_target)

    y3 = pl.pallas_call(
        functools.partial(_forward_kernel, compute_dtype=compute_dtype),
        grid=(hw // hw_tile, n, c // c_tile),             # most-steps axis leads
        in_specs=[pl.BlockSpec((None, c_tile, hw_tile),
                               lambda hi, ni, ci: (ni, ci, hi)),
                  pl.BlockSpec((c_tile, 4), lambda hi, ni, ci: (ci, 0))],
        out_specs=pl.BlockSpec((None, c_tile, hw_tile),
                               lambda hi, ni, ci: (ni, ci, hi)),
        out_shape=jax.ShapeDtypeStruct((n, c, hw), x_nchw.dtype),
        compiler_params=pltpu.CompilerParams(
            dimension_semantics=("parallel", "parallel", "parallel"),
            vmem_limit_bytes=vmem_limit),
    )(x3, folded)

    return y3.reshape(n, c, h, w)


# ----------------------------- reference (pure JAX) ------------------------ #

def _ref_stats(x, epsilon):
    mean = jnp.mean(x, axis=(0, 2, 3), keepdims=True)
    xc = x - mean
    rstd = jax.lax.rsqrt(jnp.mean(xc * xc, axis=(0, 2, 3), keepdims=True) + epsilon)
    xn = xc * rstd
    return (mean, rstd,
            jnp.min(xn, axis=(0, 2, 3), keepdims=True),
            jnp.max(xn, axis=(0, 2, 3), keepdims=True),
            xn)


# ----------------------------- main ----------------------------------------- #

if __name__ == "__main__":
    key = jax.random.PRNGKey(0)
    k_style, k_x = jax.random.split(key)

    N, C, H, W = 2, 4, 16, 16
    epsilon = 1e-8
    style_num = 1

    # "Style" tensor used to populate the saved per-channel statistics
    # (non-zero-centered to exercise the shifted-variance path).
    x_style = jax.random.normal(k_style, (N, C, H, W), dtype=jnp.float32) * 2.0 + 0.5
    # Content tensor passed to forward.
    x = jax.random.normal(k_x, (N, C, H, W), dtype=jnp.float32)

    # Populate saved stats for each style via the Pallas compute_norm kernel
    # (stats-only path: no xn writeback).  Also exercise the xn path once.
    stats_list = []
    for _ in range(style_num):
        stats, _ = instance_norm_compute_norm(x_style, epsilon)
        stats_list.append(stats)
    _, xn_pallas = instance_norm_compute_norm(x_style, epsilon,
                                              return_normalized=True)

    # Forward pass (hot elementwise path runs in the tiled Pallas kernel).
    y = instance_norm_forward(x, stats_list, style_weight=[1.0])
    y = jax.block_until_ready(y)

    # Correctness checks against a pure-JAX reference.
    m_r, s_r, mn_r, mx_r, xn_r = _ref_stats(x_style, epsilon)
    stats_ref = jnp.concatenate(
        [m_r.reshape(C, 1), s_r.reshape(C, 1),
         mn_r.reshape(C, 1), mx_r.reshape(C, 1)], axis=-1)
    y_ref = jnp.minimum(mx_r, jnp.maximum(mn_r, (x - m_r) * s_r))

    assert y.shape == (N, C, H, W)
    assert jnp.allclose(stats_list[0], stats_ref, atol=1e-4, rtol=1e-4)
    assert jnp.allclose(xn_pallas, xn_r, atol=1e-4, rtol=1e-4)
    assert jnp.allclose(y, y_ref, atol=1e-4, rtol=1e-4)

    print("KERNEL_OK")
</pallas_src>

<mosaic_0001>
module attributes {stable_mosaic.version = 11 : i64} {
  func.func @_stats_kernel(%arg0: i32, %arg1: i32, %arg2: i32, %arg3: memref<1x4x256xf32, #tpu.memory_space<vmem>>, %arg4: memref<4x4xf32, #tpu.memory_space<vmem>>, %arg5: memref<4x256xf32, #tpu.memory_space<vmem>>, %arg6: memref<4x256xf32, #tpu.memory_space<vmem>>, %arg7: memref<4x256xf32, #tpu.memory_space<vmem>>, %arg8: memref<4x256xf32, #tpu.memory_space<vmem>>, %arg9: memref<4x1xf32, #tpu.memory_space<vmem>>) attributes {dimension_semantics = [#tpu.dimension_semantics<parallel>, #tpu.dimension_semantics<arbitrary>, #tpu.dimension_semantics<arbitrary>], iteration_bounds = array<i64: 1, 2, 1>, scalar_prefetch = 0 : i64, scratch_operands = 5 : i64, tpu.core_type = #tpu.core_type<tc>, window_params = [{transform_indices = @transform_0, window_bounds = array<i64: 1, 4, 256>}, {transform_indices = @transform_1, window_bounds = array<i64: 4, 4>}]} {
    %c0_i32 = arith.constant 0 : i32
    %0 = arith.cmpi eq, %arg1, %c0_i32 : i32
    %c0_i32_0 = arith.constant 0 : i32
    %1 = arith.cmpi eq, %arg2, %c0_i32_0 : i32
    %2 = arith.andi %0, %1 : i1
    %c1_i32 = arith.constant 1 : i32
    %3 = arith.cmpi eq, %arg1, %c1_i32 : i32
    %c0_i32_1 = arith.constant 0 : i32
    %4 = arith.cmpi eq, %arg2, %c0_i32_1 : i32
    %5 = arith.andi %3, %4 : i1
    %c0 = arith.constant 0 : index
    %c0_2 = arith.constant 0 : index
    %c0_3 = arith.constant 0 : index
    %6 = vector.load %arg3[%c0, %c0_2, %c0_3] : memref<1x4x256xf32, #tpu.memory_space<vmem>>, vector<1x4x256xf32>
    %7 = vector.shape_cast %6 : vector<1x4x256xf32> to vector<4x256xf32>
    %8 = arith.extui %2 : i1 to i32
    %c0_i32_4 = arith.constant 0 : i32
    %9 = arith.cmpi ne, %8, %c0_i32_4 : i32
    scf.if %9 {
      %cst = arith.constant dense<0.000000e+00> : vector<4xf32>
      %28 = vector.multi_reduction <add>, %7, %cst [1] : vector<4x256xf32> to vector<4xf32>
      %29 = vector.shape_cast %28 : vector<4xf32> to vector<4x1xf32>
      %cst_24 = arith.constant 2.560000e+02 : f32
      %30 = vector.broadcast %cst_24 : f32 to vector<4x1xf32>
      %31 = arith.divf %29, %30 : vector<4x1xf32>
      %c0_25 = arith.constant 0 : index
      %c0_26 = arith.constant 0 : index
      %32 = vector.load %arg9[%c0_25, %c0_26] : memref<4x1xf32, #tpu.memory_space<vmem>>, vector<4x1xf32>
      tpu.vector_store %arg9[%c0_25, %c0_26], %31 {strides = array<i32>} : memref<4x1xf32, #tpu.memory_space<vmem>>, vector<4x1xf32>,
      %cst_27 = arith.constant 0.000000e+00 : f32
      %33 = vector.broadcast %cst_27 : f32 to vector<4x256xf32>
      %c0_28 = arith.constant 0 : index
      %c0_29 = arith.constant 0 : index
      %34 = vector.load %arg5[%c0_28, %c0_29] : memref<4x256xf32, #tpu.memory_space<vmem>>, vector<4x256xf32>
      tpu.vector_store %arg5[%c0_28, %c0_29], %33 {strides = array<i32>} : memref<4x256xf32, #tpu.memory_space<vmem>>, vector<4x256xf32>,
      %cst_30 = arith.constant 0.000000e+00 : f32
      %35 = vector.broadcast %cst_30 : f32 to vector<4x256xf32>
      %c0_31 = arith.constant 0 : index
      %c0_32 = arith.constant 0 : index
      %36 = vector.load %arg6[%c0_31, %c0_32] : memref<4x256xf32, #tpu.memory_space<vmem>>, vector<4x256xf32>
      tpu.vector_store %arg6[%c0_31, %c0_32], %35 {strides = array<i32>} : memref<4x256xf32, #tpu.memory_space<vmem>>, vector<4x256xf32>,
      %cst_33 = arith.constant 0x7F800000 : f32
      %37 = vector.broadcast %cst_33 : f32 to vector<4x256xf32>
      %c0_34 = arith.constant 0 : index
      %c0_35 = arith.constant 0 : index
      %38 = vector.load %arg7[%c0_34, %c0_35] : memref<4x256xf32, #tpu.memory_space<vmem>>, vector<4x256xf32>
      tpu.vector_store %arg7[%c0_34, %c0_35], %37 {strides = array<i32>} : memref<4x256xf32, #tpu.memory_space<vmem>>, vector<4x256xf32>,
      %cst_36 = arith.constant 0xFF800000 : f32
      %39 = vector.broadcast %cst_36 : f32 to vector<4x256xf32>
      %c0_37 = arith.constant 0 : index
      %c0_38 = arith.constant 0 : index
      %40 = vector.load %arg8[%c0_37, %c0_38] : memref<4x256xf32, #tpu.memory_space<vmem>>, vector<4x256xf32>
      tpu.vector_store %arg8[%c0_37, %c0_38], %39 {strides = array<i32>} : memref<4x256xf32, #tpu.memory_space<vmem>>, vector<4x256xf32>,
    } else {
    }
    %c0_5 = arith.constant 0 : index
    %c0_6 = arith.constant 0 : index
    %10 = vector.load %arg9[%c0_5, %c0_6] : memref<4x1xf32, #tpu.memory_space<vmem>>, vector<4x1xf32>
    %11 = vector.broadcast %10 : vector<4x1xf32> to vector<4x256xf32>
    %12 = arith.subf %7, %11 : vector<4x256xf32>
    %c0_7 = arith.constant 0 : index
    %c0_8 = arith.constant 0 : index
    %13 = vector.load %arg5[%c0_7, %c0_8] : memref<4x256xf32, #tpu.memory_space<vmem>>, vector<4x256xf32>
    %14 = arith.addf %13, %12 : vector<4x256xf32>
    %c0_9 = arith.constant 0 : index
    %c0_10 = arith.constant 0 : index
    %15 = vector.load %arg5[%c0_9, %c0_10] : memref<4x256xf32, #tpu.memory_space<vmem>>, vector<4x256xf32>
    tpu.vector_store %arg5[%c0_9, %c0_10], %14 {strides = array<i32>} : memref<4x256xf32, #tpu.memory_space<vmem>>, vector<4x256xf32>,
    %c0_11 = arith.constant 0 : index
    %c0_12 = arith.constant 0 : index
    %16 = vector.load %arg6[%c0_11, %c0_12] : memref<4x256xf32, #tpu.memory_space<vmem>>, vector<4x256xf32>
    %17 = arith.mulf %12, %12 : vector<4x256xf32>
    %18 = arith.addf %16, %17 : vector<4x256xf32>
    %c0_13 = arith.constant 0 : index
    %c0_14 = arith.constant 0 : index
    %19 = vector.load %arg6[%c0_13, %c0_14] : memref<4x256xf32, #tpu.memory_space<vmem>>, vector<4x256xf32>
    tpu.vector_store %arg6[%c0_13, %c0_14], %18 {strides = array<i32>} : memref<4x256xf32, #tpu.memory_space<vmem>>, vector<4x256xf32>,
    %c0_15 = arith.constant 0 : index
    %c0_16 = arith.constant 0 : index
    %20 = vector.load %arg7[%c0_15, %c0_16] : memref<4x256xf32, #tpu.memory_space<vmem>>, vector<4x256xf32>
    %21 = arith.minimumf %20, %7 : vector<4x256xf32>
    %c0_17 = arith.constant 0 : index
    %c0_18 = arith.constant 0 : index
    %22 = vector.load %arg7[%c0_17, %c0_18] : memref<4x256xf32, #tpu.memory_space<vmem>>, vector<4x256xf32>
    tpu.vector_store %arg7[%c0_17, %c0_18], %21 {strides = array<i32>} : memref<4x256xf32, #tpu.memory_space<vmem>>, vector<4x256xf32>,
    %c0_19 = arith.constant 0 : index
    %c0_20 = arith.constant 0 : index
    %23 = vector.load %arg8[%c0_19, %c0_20] : memref<4x256xf32, #tpu.memory_space<vmem>>, vector<4x256xf32>
    %24 = arith.maximumf %23, %7 : vector<4x256xf32>
    %c0_21 = arith.constant 0 : index
    %c0_22 = arith.constant 0 : index
    %25 = vector.load %arg8[%c0_21, %c0_22] : memref<4x256xf32, #tpu.memory_space<vmem>>, vector<4x256xf32>
    tpu.vector_store %arg8[%c0_21, %c0_22], %24 {strides = array<i32>} : memref<4x256xf32, #tpu.memory_space<vmem>>, vector<4x256xf32>,
    %26 = arith.extui %5 : i1 to i32
    %c0_i32_23 = arith.constant 0 : i32
    %27 = arith.cmpi ne, %26, %c0_i32_23 : i32
    scf.if %27 {
      %c0_24 = arith.constant 0 : index
      %c0_25 = arith.constant 0 : index
      %28 = vector.load %arg5[%c0_24, %c0_25] : memref<4x256xf32, #tpu.memory_space<vmem>>, vector<4x256xf32>
      %cst = arith.constant dense<0.000000e+00> : vector<4xf32>
      %29 = vector.multi_reduction <add>, %28, %cst [1] : vector<4x256xf32> to vector<4xf32>
      %30 = vector.shape_cast %29 : vector<4xf32> to vector<4x1xf32>
      %c0_26 = arith.constant 0 : index
      %c0_27 = arith.constant 0 : index
      %31 = vector.load %arg6[%c0_26, %c0_27] : memref<4x256xf32, #tpu.memory_space<vmem>>, vector<4x256xf32>
      %cst_28 = arith.constant dense<0.000000e+00> : vector<4xf32>
      %32 = vector.multi_reduction <add>, %31, %cst_28 [1] : vector<4x256xf32> to vector<4xf32>
      %33 = vector.shape_cast %32 : vector<4xf32> to vector<4x1xf32>
      %c0_29 = arith.constant 0 : index
      %c0_30 = arith.constant 0 : index
      %34 = vector.load %arg7[%c0_29, %c0_30] : memref<4x256xf32, #tpu.memory_space<vmem>>, vector<4x256xf32>
      %cst_31 = arith.constant dense<0x7F800000> : vector<4xf32>
      %35 = vector.multi_reduction <minimumf>, %34, %cst_31 [1] : vector<4x256xf32> to vector<4xf32>
      %36 = vector.shape_cast %35 : vector<4xf32> to vector<4x1xf32>
      %c0_32 = arith.constant 0 : index
      %c0_33 = arith.constant 0 : index
      %37 = vector.load %arg8[%c0_32, %c0_33] : memref<4x256xf32, #tpu.memory_space<vmem>>, vector<4x256xf32>
      %cst_34 = arith.constant dense<0xFF800000> : vector<4xf32>
      %38 = vector.multi_reduction <maximumf>, %37, %cst_34 [1] : vector<4x256xf32> to vector<4xf32>
      %39 = vector.shape_cast %38 : vector<4xf32> to vector<4x1xf32>
      %cst_35 = arith.constant 0.001953125 : f32
      %40 = vector.broadcast %cst_35 : f32 to vector<4x1xf32>
      %41 = arith.mulf %30, %40 : vector<4x1xf32>
      %c0_36 = arith.constant 0 : index
      %c0_37 = arith.constant 0 : index
      %42 = vector.load %arg9[%c0_36, %c0_37] : memref<4x1xf32, #tpu.memory_space<vmem>>, vector<4x1xf32>
      %43 = arith.addf %42, %41 : vector<4x1xf32>
      %cst_38 = arith.constant 0.001953125 : f32
      %44 = vector.broadcast %cst_38 : f32 to vector<4x1xf32>
      %45 = arith.mulf %33, %44 : vector<4x1xf32>
      %46 = arith.mulf %41, %41 : vector<4x1xf32>
      %47 = arith.subf %45, %46 : vector<4x1xf32>
      %cst_39 = arith.constant 0.000000e+00 : f32
      %48 = vector.broadcast %cst_39 : f32 to vector<4x1xf32>
      %49 = arith.maximumf %47, %48 : vector<4x1xf32>
      %cst_40 = arith.constant 9.99999993E-9 : f32
      %50 = vector.broadcast %cst_40 : f32 to vector<4x1xf32>
      %51 = arith.addf %49, %50 : vector<4x1xf32>
      %52 = math.rsqrt %51 : vector<4x1xf32>
      %53 = arith.subf %36, %43 : vector<4x1xf32>
      %54 = arith.mulf %53, %52 : vector<4x1xf32>
      %55 = arith.subf %39, %43 : vector<4x1xf32>
      %56 = arith.mulf %55, %52 : vector<4x1xf32>
      %57 = tpu.concatenate %43, %52, %54, %56 in 1 : vector<4x1xf32>, vector<4x1xf32>, vector<4x1xf32>, vector<4x1xf32> -> vector<4x4xf32>
      %c0_41 = arith.constant 0 : index
      %c0_42 = arith.constant 0 : index
      %58 = vector.load %arg4[%c0_41, %c0_42] : memref<4x4xf32, #tpu.memory_space<vmem>>, vector<4x4xf32>
      tpu.vector_store %arg4[%c0_41, %c0_42], %57 {strides = array<i32>} : memref<4x4xf32, #tpu.memory_space<vmem>>, vector<4x4xf32>,
    } else {
    }
    return
  }
  func.func @transform_0(%arg0: i32, %arg1: i32, %arg2: i32) -> (i32, i32, i32) {
    %c0_i32 = arith.constant 0 : i32
    return %arg1, %arg0, %arg2 : i32, i32, i32
  }
  func.func @transform_1(%arg0: i32, %arg1: i32, %arg2: i32) -> (i32, i32) {
    %c0_i32 = arith.constant 0 : i32
    %c0_i32_0 = arith.constant 0 : i32
    return %arg0, %c0_i32 : i32, i32
  }
}

</mosaic_0001>

<llo_original>
// kernel: tpu_custom_call.1
$region0: #{tpu_custom_call.1}
  #allocation0 [shape = 'u32[]', space=smem, size = 0x4, offset = 0x4, fixed_abs, tag = 'smem constant byte address 0x4 - core index']
  #allocation1 [shape = 'u32[144,128]{1,0:T(1,128)}', space=vmem, size = 0x12000, scoped, tag = 'internal scratch']
  #allocation2 [shape = 'f32[4,256]{1,0:T(4,128)}', space=vmem, size = 0x1000, scoped, tag = 'scratch operand']
  #allocation3 [shape = 'f32[4,256]{1,0:T(4,128)}', space=vmem, size = 0x1000, scoped, tag = 'scratch operand']
  #allocation4 [shape = 'f32[4,256]{1,0:T(4,128)}', space=vmem, size = 0x1000, scoped, tag = 'scratch operand']
  #allocation5 [shape = 'f32[4,256]{1,0:T(4,128)}', space=vmem, size = 0x1000, scoped, tag = 'scratch operand']
  #allocation6 [shape = 'f32[4,1]{1,0:T(4,128)}', space=vmem, size = 0x800, scoped, tag = 'scratch operand']
  %s0 = inlined_call_operand.hbm [shape: f32[2,4,256], index: 0, kind: input, shape index: {}]
  %s1 = inlined_call_operand.hbm [shape: f32[4,4], index: 1, kind: output, shape index: {}]
  %s2 = sld [smem:[#allocation0]]
  $region49: #{tpu_custom_call.1} parent=0
    _
  %s4 = ssub.s32 1, %s2
  %s5 = scalar_select 0, %s4, %s2
  $region1: #{tpu_custom_call.1} parent=0
    #allocation7 [shape = 'u8[8192]{0}', space=vmem, size = 0x2000, scoped, tag = 'input window, operand 0']
    #allocation8 [shape = 's32[2]{0}', space=sflag, size = 0x8, scoped, tag = 'scoped memory for tpu_custom_call.1']
    #allocation9 [shape = 's32[2]{0}', space=sflag, size = 0x8, scoped, tag = 'scoped memory for tpu_custom_call.1']
    #allocation10 [shape = 'u8[2048]{0}', space=vmem, size = 0x800, scoped, tag = 'output window, operand 0, single buffered']
    %6 = vsyncpa [#allocation8], 0
    %s7 = scalar_lea.sflag [#allocation8], 1
    %8 = vsyncpa %s7, 0
    %9 = vsyncpa [#allocation9], 0
    loop: start=0, step=1, limit=4
    $region2: #{tpu_custom_call.1} parent=1 // loop_pre_header
      _
    $region3: #{tpu_custom_call.1} parent=1 // loop_header
      %s11 = sphi 0, %s15
      %p12 = scmp.ge.s32.totalorder %s11, 4
      %s18 = sphi 0, %s37
      %s19 = sphi 0, %s33
      %s20 = sphi 0, %s29
      %s21 = sphi 0, %s18
      %s22 = sphi 0, %s19
      %s23 = sphi 0, %s20
      %s24 = sphi 0, %s21
      %s25 = sphi 0, %s22
      %s26 = sphi 0, %s23
      %s44 = sphi 0, %s46
      %s47 = sphi 0, %s44
      %s48 = sphi 0, %s47
      %s64 = sphi 0, %s48
      %s70 = sphi 0, %s72
      %s73 = sphi 0, %s70
      %s74 = sphi 0, %s73
      %s90 = sphi 0, %s74
    $region4: #{tpu_custom_call.1} parent=1 // loop_header_branch
      %14 = sbr.rel (%p12) target = $region8
    $region5: #{tpu_custom_call.1} parent=1 // loop_body
      %s16 = ssub.s32 %s11, 1
      %s17 = ssub.s32 %s11, 2
      %s27 = sadd.s32 1, %s20
      %p28 = scmp.ge.s32.totalorder %s27, 1
      %s29 = scalar_select %p28, 0, %s27
      %s30 = sadd.s32 1, %s19
      %s31 = scalar_select %p28, %s30, %s19
      %p32 = scmp.ge.s32.totalorder %s31, 2
      %s33 = scalar_select %p32, 0, %s31
      %s34 = sadd.s32 1, %s18
      %s35 = scalar_select %p32, %s34, %s18
      %p36 = scmp.ge.s32.totalorder %s35, 1
      %s37 = scalar_select %p36, 0, %s35
      %s38 = ssub.s32 %s19, %s33
      %s39 = ssub.s32 %s18, %s37
      %s40 = sor.u32 %s38, %s39
      %s41 = ssub.s32 %s20, %s29
      %s42 = sor.u32 %s40, %s41
      %p43 = scmp.eq.s32.totalorder %s42, 0
      %s45 = sadd.s32 %s44, 1
      %s46 = scalar_select %p43, %s44, %s45
      %p49 = pneg %p43
      %p50 = scmp.eq.s32.totalorder %s11, 1
      %p51 = por %p49, %p50
      %p52 = scmp.ne.s32.totalorder %s44, %s47
      %p53 = scmp.eq.s32.totalorder %s11, 0
      %p54 = por %p52, %p53
      %p55 = scmp.ne.s32.totalorder %s44, %s47
      %p56 = scmp.eq.s32.totalorder %s16, 1
      %p57 = por %p55, %p56
      %p58 = scmp.ne.s32.totalorder %s47, %s48
      %p59 = scmp.eq.s32.totalorder %s16, 0
      %p60 = por %p58, %p59
      %p61 = scmp.ne.s32.totalorder %s47, %s48
      %p62 = scmp.eq.s32.totalorder %s17, 1
      %p63 = por %p61, %p62
      %p65 = scmp.ne.s32.totalorder %s48, %s64
      %p66 = scmp.eq.s32.totalorder %s17, 0
      %p67 = por %p65, %p66
      %s68 = ssub.s32 %s18, %s37
      %p69 = scmp.eq.s32.totalorder %s68, 0
      %s71 = sadd.s32 %s70, 1
      %s72 = scalar_select %p69, %s70, %s71
      %p75 = pneg %p69
      %p76 = scmp.eq.s32.totalorder %s11, 1
      %p77 = por %p75, %p76
      %p78 = scmp.ne.s32.totalorder %s70, %s73
      %p79 = scmp.eq.s32.totalorder %s11, 0
      %p80 = por %p78, %p79
      %p81 = scmp.ne.s32.totalorder %s70, %s73
      %p82 = scmp.eq.s32.totalorder %s16, 1
      %p83 = por %p81, %p82
      %p84 = scmp.ne.s32.totalorder %s73, %s74
      %p85 = scmp.eq.s32.totalorder %s16, 0
      %p86 = por %p84, %p85
      %p87 = scmp.ne.s32.totalorder %s73, %s74
      %p88 = scmp.eq.s32.totalorder %s17, 1
      %p89 = por %p87, %p88
      %p91 = scmp.ne.s32.totalorder %s74, %s90
      %p92 = scmp.eq.s32.totalorder %s17, 0
      %p93 = por %p91, %p92
      %p94 = scmp.le.s32.totalorder 1, %s11
      %p95 = scmp.lt.s32.totalorder %s11, 3
      %p96 = pnand %p94, %p95
      %p97 = pneg %p96
      // Predicated region
      $region9: #{tpu_custom_call.1} parent=5 // pred_check
        _
      $region10: #{tpu_custom_call.1} parent=5 // pred_check_branch
        %99 = sbr.rel (%p96) target = $region12
      $region11: #{tpu_custom_call.1} parent=5 // pred_region
        %s100 = ssub.s32 %s11, 1
      $region12: #{tpu_custom_call.1} parent=5 // pred_fallthru
        _
      %p101 = scmp.lt.s32.totalorder %s11, 2
      // Predicated region
      $region13: #{tpu_custom_call.1} parent=5 // pred_check
        %p102 = pneg %p101
      $region14: #{tpu_custom_call.1} parent=5 // pred_check_branch
        %104 = sbr.rel (%p102) target = $region16
      $region15: #{tpu_custom_call.1} parent=5 // pred_region
        // Predicated region
        $region17: #{tpu_custom_call.1} parent=15 // pred_check
          %p105 = pneg %p54
        $region18: #{tpu_custom_call.1} parent=15 // pred_check_branch
          %107 = sbr.rel (%p105) target = $region20
        $region19: #{tpu_custom_call.1} parent=15 // pred_region
          %s108 = sand.u32 %s44, 1
          %s109 = scalar_lea.sflag [#allocation8], %s108
          %s110 = sand.u32 %s44, 1
          %s111 = smul.addr %s110, 8
          %s112 = scalar_lea.vmem [#allocation7], %s111
          %s113 = smul.u32 2, %s20
          %s115 = ssub.s32 128, 128
          %116 = vsyncadd %s109, %s115
          %s117 = smul.addr %s18, 2
          %s118 = sadd.s32 %s113, %s117
          %s119 = smul.addr %s19, 2
          %s120 = sadd.s32 %s118, %s119
          %s121 = smul.addr %s120, 64
          %s122 = scalar_lea.hbm %s0, %s121
          %s124 = sshll.u32 %s112, 4
          %s125 = int_to_ptr.vmem [resolvable:$true] %s124
          %127 = dma.hbm_to_vmem [thread:$0]  %s122, 128, %s125, %s109
        $region20: #{tpu_custom_call.1} parent=15 // pred_fallthru
          _
      $region16: #{tpu_custom_call.1} parent=5 // pred_fallthru
        _
      %p128 = scmp.le.s32.totalorder 1, %s11
      %p129 = scmp.lt.s32.totalorder %s11, 3
      %p130 = pnand %p128, %p129
      %p131 = pneg %p130
      // Predicated region
      $region21: #{tpu_custom_call.1} parent=5 // pred_check
        _
      $region22: #{tpu_custom_call.1} parent=5 // pred_check_branch
        %133 = sbr.rel (%p130) target = $region24
      $region23: #{tpu_custom_call.1} parent=5 // pred_region
        %s134 = ssub.s32 %s11, 1
        %s135 = sand.u32 %s47, 1
        %s136 = scalar_lea.sflag [#allocation8], %s135
        %s137 = sand.u32 %s47, 1
        %s138 = smul.addr %s137, 8
        %s139 = scalar_lea.vmem [#allocation7], %s138
        // Predicated region
        $region25: #{tpu_custom_call.1} parent=23 // pred_check
          %p140 = pneg %p60
        $region26: #{tpu_custom_call.1} parent=23 // pred_check_branch
          %142 = sbr.rel (%p140) target = $region28
        $region27: #{tpu_custom_call.1} parent=23 // pred_region
          %143 = dma.done %s136, 128
        $region28: #{tpu_custom_call.1} parent=23 // pred_fallthru
          _
        %s144 = sand.u32 %s47, 1
        %s145 = scalar_lea.sflag [#allocation8], %s144
        %s146 = sand.u32 %s47, 1
        %s147 = smul.addr %s146, 8
        %s148 = scalar_lea.vmem [#allocation7], %s147
        %p149 = pneg %p60
        %p150 = pneg %p57
        %p151 = pneg %p86
        %p152 = pneg %p83
        %s153 = smul.u32 2, %s23
        %p154 = scmp.eq.s32.totalorder %s22, 0
        %p155 = scmp.eq.s32.totalorder %s23, 0
        %p156 = pnand %p154, %p155
        %p157 = pneg %p156
        %p158 = scmp.eq.s32.totalorder %s22, 1
        %p159 = pnand %p158, %p155
        %p160 = pneg %p159
        %v161 = vld [vmem:[%s139] sm:$0xff]
        // Predicated region
        $region29: #{tpu_custom_call.1} parent=23 // pred_check
          _
        $region30: #{tpu_custom_call.1} parent=23 // pred_check_branch
          %163 = sbr.rel (%p156) target = $region32
        $region31: #{tpu_custom_call.1} parent=23 // pred_region
          %v165 = vcombine.high %v161, %v161
          %vm167 = vcmask 1043456
          %v168 = vsel %vm167, %v161, 0.0
          %v169 = vsel %vm167, %v165, 0.0
          %v170 = vadd.f32 %v168, %v169
          %171 = vadd.xlane.f32.xlu0 %v170
          %v172 = vpop.xlane.xlu0 %171
          %v173 = vrcp.pop 256.0
          %v174 = vmul.f32 %v172, %v173
          %vm175 = vcmask 3072
          %176 = vst.msk [vmem:[#allocation6] sm:$0xf] %vm175, %v174
          %177 = vst [vmem:[#allocation2] sm:$0xff] 0.0
          %178 = vst [vmem:[#allocation3] sm:$0xff] 0.0
          %179 = vst [vmem:[#allocation4] sm:$0xff] inf
          %180 = vst [vmem:[#allocation5] sm:$0xff] -inf
        $region32: #{tpu_custom_call.1} parent=23 // pred_fallthru
          _
        %v181 = vld [vmem:[#allocation6] sm:$0xf]
        %183 = vset.pattern.permute.xlu0 0
        %184 = vperm.xlu0 %183, %v181
        %v185 = vpop.permute.xlu0 %184
        %v187 = vunpack.c.l.s4 839922192
        %v188 = vunpack.c.0.s8 %v187
        %v189 = vlaneseq
        %v190 = vshrl.u32 %v189, 7
        %v191 = vsub.s32 %v188, %v190
        %v192 = vrot.slane %v185, %v191
        %v194 = vsub.f32 %v161, %v192
        %v195 = vld [vmem:[#allocation2] sm:$0xff]
        %v196 = vadd.f32 %v195, %v194
        %197 = vst [vmem:[#allocation2] sm:$0xff] %v196
        %v198 = vld [vmem:[#allocation3] sm:$0xff]
        %v199 = vmul.f32 %v194, %v194
        %v200 = vadd.f32 %v198, %v199
        %201 = vst [vmem:[#allocation3] sm:$0xff] %v200
        %v202 = vld [vmem:[#allocation4] sm:$0xff]
        %v203 = vmin.f32 %v202, %v161
        %204 = vst [vmem:[#allocation4] sm:$0xff] %v203
        %v205 = vld [vmem:[#allocation5] sm:$0xff]
        %v206 = vmax.f32 %v205, %v161
        %207 = vst [vmem:[#allocation5] sm:$0xff] %v206
        // Predicated region
        $region33: #{tpu_custom_call.1} parent=23 // pred_check
          _
        $region34: #{tpu_custom_call.1} parent=23 // pred_check_branch
          %209 = sbr.rel (%p159) target = $region36
        $region35: #{tpu_custom_call.1} parent=23 // pred_region
          %v210 = vld [vmem:[#allocation2] sm:$0xff]
          %v212 = vcombine.high %v210, %v210
          %vm214 = vcmask 1043456
          %v215 = vsel %vm214, %v210, 0.0
          %v216 = vsel %vm214, %v212, 0.0
          %v217 = vadd.f32 %v215, %v216
          %218 = vadd.xlane.f32.xlu0 %v217
          %v219 = vpop.xlane.xlu0 %218
          %v220 = vld [vmem:[#allocation3] sm:$0xff]
          %v222 = vcombine.high %v220, %v220
          %v224 = vsel %vm214, %v220, 0.0
          %v225 = vsel %vm214, %v222, 0.0
          %v226 = vadd.f32 %v224, %v225
          %227 = vadd.xlane.f32.xlu0 %v226
          %v228 = vpop.xlane.xlu0 %227
          %v229 = vld [vmem:[#allocation4] sm:$0xff]
          %v231 = vcombine.high %v229, %v229
          %v233 = vsel %vm214, %v229, inf
          %v234 = vsel %vm214, %v231, inf
          %v235 = vmin.f32 %v233, %v234
          %236 = vmin.xlane.f32.xlu0 %v235
          %v237 = vpop.xlane.xlu0 %236
          %v238 = vld [vmem:[#allocation5] sm:$0xff]
          %v240 = vcombine.high %v238, %v238
          %v242 = vsel %vm214, %v238, -inf
          %v243 = vsel %vm214, %v240, -inf
          %v244 = vmax.f32 %v242, %v243
          %245 = vmax.xlane.f32.xlu0 %v244
          %v246 = vpop.xlane.xlu0 %245
          %v247 = vmul.f32 %v219, 0.001953125
          %v248 = vld [vmem:[#allocation6] sm:$0xf]
          %v249 = vadd.f32 %v248, %v247
          %v250 = vmul.f32 %v228, 0.001953125
          %v251 = vmul.f32 %v247, %v247
          %v252 = vsub.f32 %v250, %v251
          %v253 = vmax.f32 %v252, 0.0
          %v254 = vadd.f32 %v253, 1e-08
          %v255 = vrsqrt.pop %v254
          %v256 = vsub.f32 %v237, %v249
          %v257 = vmul.f32 %v256, %v255
          %v258 = vsub.f32 %v246, %v249
          %v259 = vmul.f32 %v258, %v255
          %261 = vrot.lane.b32.xlu0 %v257, 2
          %v262 = vpop.permute.xlu0 %261
          %265 = vrot.lane.b32.xlu0 %v259, 3
          %v266 = vpop.permute.xlu0 %265
          %vm268 = vcmask 7168
          %v269 = vsel %vm268, %v249, %v255
          %vm270 = vcmask 15360
          %v271 = vsel %vm270, %v269, %v262
          %vm272 = vcmask 23552
          %v273 = vsel %vm272, %v271, %v266
          %vm274 = vcmask 27648
          %275 = vst.msk [vmem:[#allocation10] sm:$0xf] %vm274, %v273
        $region36: #{tpu_custom_call.1} parent=23 // pred_fallthru
          _
        // Predicated region
        $region37: #{tpu_custom_call.1} parent=23 // pred_check
          %p276 = pneg %p83
        $region38: #{tpu_custom_call.1} parent=23 // pred_check_branch
          %278 = sbr.rel (%p276) target = $region40
        $region39: #{tpu_custom_call.1} parent=23 // pred_region
          %s280 = ssub.s32 64, 64
          %281 = vsyncadd [#allocation9], %s280
          %s282 = smul.addr %s21, 64
          %s283 = scalar_lea.hbm %s1, %s282
          %s285 = sshll.u32 [#allocation10], 4
          %s286 = int_to_ptr.vmem [resolvable:$true] %s285
          %288 = dma.vmem_to_hbm [thread:$0]  %s286, 64, %s283, [#allocation9]
        $region40: #{tpu_custom_call.1} parent=23 // pred_fallthru
          _
        // Predicated region
        $region41: #{tpu_custom_call.1} parent=23 // pred_check
          %p289 = pneg %p83
        $region42: #{tpu_custom_call.1} parent=23 // pred_check_branch
          %291 = sbr.rel (%p289) target = $region44
        $region43: #{tpu_custom_call.1} parent=23 // pred_region
          %292 = dma.done [#allocation9], 64
        $region44: #{tpu_custom_call.1} parent=23 // pred_fallthru
          _
      $region24: #{tpu_custom_call.1} parent=5 // pred_fallthru
        _
      %p293 = scmp.le.s32.totalorder 2, %s11
      // Predicated region
      $region45: #{tpu_custom_call.1} parent=5 // pred_check
        %p294 = pneg %p293
      $region46: #{tpu_custom_call.1} parent=5 // pred_check_branch
        %296 = sbr.rel (%p294) target = $region48
      $region47: #{tpu_custom_call.1} parent=5 // pred_region
        %s297 = ssub.s32 %s11, 2
      $region48: #{tpu_custom_call.1} parent=5 // pred_fallthru
        _
    $region6: #{tpu_custom_call.1} parent=1 // loop_footer
      %s15 = sadd.s32 1, %s11
    $region7: #{tpu_custom_call.1} parent=1 // loop_footer_branch
      %10 = sbr.rel target = $region3
    $region8: #{tpu_custom_call.1} parent=1 // loop_exit
      _
    %298 = vsyncpa [#allocation8], 1
    %s299 = scalar_lea.sflag [#allocation8], 1
    %300 = vsyncpa %s299, 1
    %301 = vsyncpa [#allocation9], 1
    %s302 = scalar_lea.sflag [#allocation9], 1
    %303 = vsyncpa %s302, 1

</llo_original>
